<compile_context>
chip_gen: v5e
topology: v5e:2x2
jax: 0.10.0
libtpu: 0.0.40
codegen_flags: <defaults>
</compile_context>

<pallas_src>
import jax
import jax.numpy as jnp
from jax.experimental import pallas as pl
from jax.experimental.pallas import tpu as pltpu


def _make_lambda_kernel(func):
    """Pallas kernel body that applies `func` elementwise to the current tile."""

    def kernel(x_ref, o_ref):
        o_ref[...] = func(x_ref[...]).astype(o_ref.dtype)

    return kernel


def _widest_lane_width(n, max_c, lane=128):
    """Largest multiple of `lane` that divides n, capped at max_c (0 if none)."""
    for k in range(min(max_c, n) // lane, 0, -1):
        if n % (k * lane) == 0:
            return k * lane
    return 0


def tensor_lambda(func, x, *, target_block_bytes=4 * 1024 * 1024):
    """Pallas equivalent of TensorLambda(func)(x) for elementwise funcs.

    Layout glue (flatten / reshape) stays in plain JAX; `func` itself runs
    inside the Pallas kernel on large lane-dense VMEM blocks.
    """
    orig_shape = x.shape
    in_dtype = x.dtype
    n = x.size
    itemsize = jnp.dtype(in_dtype).itemsize

    LANE = 128
    # dtype-aware sublane multiple: f32 -> 8, bf16/f16 -> 16, int8/fp8 -> 32
    sublane = {4: 8, 2: 16, 1: 32}.get(itemsize, 8)
    MAX_C = 8192  # cap on lane width of the slab

    flat = x.reshape(-1)

    if n % LANE == 0:
        # Common case: no padding / no extra HBM copy.  Pick the widest lane
        # width (multiple of 128) that divides n -> lane-dense, unmasked stores.
        C = _widest_lane_width(n, MAX_C, LANE)
        pad = 0
        padded_flat = flat
    else:
        # Rare fallback: pad up to the next (sublane*128)-aligned size.  This is
        # the only path that materializes an extra copy of the tensor.
        # TODO(synk): avoid this copy by masking the tail tile's load/store.
        block_elems = sublane * LANE
        padded_n = ((n + block_elems - 1) // block_elems) * block_elems
        pad = padded_n - n
        padded_flat = jnp.concatenate([flat, jnp.zeros((pad,), dtype=in_dtype)])
        C = _widest_lane_width(padded_n, MAX_C, LANE)

    rows = padded_flat.size // C
    slab = padded_flat.reshape(rows, C)

    # Block rows: aim for ~target_block_bytes per block, rounded to the
    # dtype-native sublane multiple.  Small inputs become a single full-extent
    # block (grid=(1,)) with no pipelining overhead.
    max_block_rows = max(sublane, (target_block_bytes // (C * itemsize)) // sublane * sublane)
    if rows <= max_block_rows:
        block_rows = rows  # full-extent block shape is always legal
    else:
        block_rows = max_block_rows

    grid = (pl.cdiv(rows, block_rows),)

    # Forward-pass semantics: output dtype/shape come from func itself.  The
    # kernel only supports shape-preserving (elementwise) funcs.
    out_aval = jax.eval_shape(func, jax.ShapeDtypeStruct((block_rows, C), in_dtype))
    assert out_aval.shape == (block_rows, C), (
        "tensor_lambda Pallas kernel only supports elementwise (shape-preserving) funcs"
    )
    out_dtype = out_aval.dtype

    block_bytes = block_rows * C * max(itemsize, jnp.dtype(out_dtype).itemsize)
    # in + out, double-buffered -> ~4x block_bytes; leave headroom, stay well
    # under v7x's 64 MiB physical VMEM.
    vmem_limit = int(min(96 * 1024 * 1024, max(32 * 1024 * 1024, 6 * block_bytes)))

    kernel = _make_lambda_kernel(func)

    out_slab = pl.pallas_call(
        kernel,
        out_shape=jax.ShapeDtypeStruct((rows, C), out_dtype),
        grid_spec=pl.GridSpec(
            grid=grid,
            in_specs=[pl.BlockSpec((block_rows, C), lambda i: (i, 0))],
            out_specs=pl.BlockSpec((block_rows, C), lambda i: (i, 0)),
        ),
        compiler_params=pltpu.CompilerParams(
            dimension_semantics=("parallel",),  # shards grid across v7x's 2 TCs
            vmem_limit_bytes=vmem_limit,
        ),
    )(slab)

    out_flat = out_slab.reshape(-1)
    if pad:
        out_flat = out_flat[:n]
    return out_flat.reshape(orig_shape)


# TODO(synk): TensorLambda can also wrap non-elementwise functions (reshapes,
# permutes, reductions); those are layout glue / shape-changing ops with no
# elementwise hot path and are not expressible in this tile-local kernel.


if __name__ == "__main__":
    # Example lambda matching how TensorLambda is used inside Sequential
    # blocks: a deterministic elementwise function.
    example_func = lambda t: jax.nn.relu(t) * 2.0 + 1.0

    key = jax.random.PRNGKey(0)
    x = jax.random.normal(key, (2, 4, 16, 16), dtype=jnp.float32)  # NCHW

    y = tensor_lambda(example_func, x)
    y = jax.block_until_ready(y)

    y_ref = example_func(x)
    assert y.shape == x.shape and y.dtype == y_ref.dtype
    assert jnp.allclose(y, y_ref, atol=1e-6), "mismatch vs reference (aligned path)"

    # Exercise the non-128-divisible fallback path as well.
    x2 = jax.random.normal(jax.random.PRNGKey(1), (3, 5, 7), dtype=jnp.float32)
    y2 = jax.block_until_ready(tensor_lambda(example_func, x2))
    assert jnp.allclose(y2, example_func(x2), atol=1e-6), "mismatch vs reference (pad path)"

    print("KERNEL_OK")
</pallas_src>

<mosaic_0001>
module attributes {stable_mosaic.version = 11 : i64} {
  func.func @kernel(%arg0: i32, %arg1: memref<1x2048xf32, #tpu.memory_space<vmem>>, %arg2: memref<1x2048xf32, #tpu.memory_space<vmem>>) attributes {dimension_semantics = [#tpu.dimension_semantics<parallel>], iteration_bounds = array<i64: 1>, scalar_prefetch = 0 : i64, scratch_operands = 0 : i64, tpu.core_type = #tpu.core_type<tc>, window_params = [{transform_indices = @transform_0, window_bounds = array<i64: 1, 2048>}, {transform_indices = @transform_1, window_bounds = array<i64: 1, 2048>}]} {
    %c0 = arith.constant 0 : index
    %c0_0 = arith.constant 0 : index
    %0 = vector.load %arg1[%c0, %c0_0] : memref<1x2048xf32, #tpu.memory_space<vmem>>, vector<1x2048xf32>
    %cst = arith.constant 0.000000e+00 : f32
    %1 = vector.broadcast %cst : f32 to vector<1x2048xf32>
    %2 = arith.maximumf %0, %1 : vector<1x2048xf32>
    %cst_1 = arith.constant 2.000000e+00 : f32
    %3 = vector.broadcast %cst_1 : f32 to vector<1x2048xf32>
    %4 = arith.mulf %2, %3 : vector<1x2048xf32>
    %cst_2 = arith.constant 1.000000e+00 : f32
    %5 = vector.broadcast %cst_2 : f32 to vector<1x2048xf32>
    %6 = arith.addf %4, %5 : vector<1x2048xf32>
    %c0_3 = arith.constant 0 : index
    %c0_4 = arith.constant 0 : index
    %7 = vector.load %arg2[%c0_3, %c0_4] : memref<1x2048xf32, #tpu.memory_space<vmem>>, vector<1x2048xf32>
    tpu.vector_store %arg2[%c0_3, %c0_4], %6 {strides = array<i32>} : memref<1x2048xf32, #tpu.memory_space<vmem>>, vector<1x2048xf32>,
    return
  }
  func.func @transform_0(%arg0: i32) -> (i32, i32) {
    %c0_i32 = arith.constant 0 : i32
    %c0_i32_0 = arith.constant 0 : i32
    return %arg0, %c0_i32 : i32, i32
  }
  func.func @transform_1(%arg0: i32) -> (i32, i32) {
    %c0_i32 = arith.constant 0 : i32
    %c0_i32_0 = arith.constant 0 : i32
    return %arg0, %c0_i32 : i32, i32
  }
}

</mosaic_0001>

<llo_original>
// kernel: tpu_custom_call.1
$region0: #{tpu_custom_call.1}
  #allocation0 [shape = 'u32[]', space=smem, size = 0x4, offset = 0x4, fixed_abs, tag = 'smem constant byte address 0x4 - core index']
  #allocation1 [shape = 'u32[72,128]{1,0:T(1,128)}', space=vmem, size = 0x9000, scoped, tag = 'internal scratch']
  %s0 = inlined_call_operand.hbm [shape: f32[1,2048], index: 0, kind: input, shape index: {}]
  %s1 = inlined_call_operand.hbm [shape: f32[1,2048], index: 1, kind: output, shape index: {}]
  %s2 = sld [smem:[#allocation0]]
  $region18: #{tpu_custom_call.1} parent=0
    _
  %s4 = ssub.s32 1, %s2
  %s5 = scalar_select 0, %s4, %s2
  $region1: #{tpu_custom_call.1} parent=0
    #allocation2 [shape = 'u8[8192]{0}', space=vmem, size = 0x2000, scoped, tag = 'input window, operand 0, single buffered']
    #allocation3 [shape = 's32[1]{0}', space=sflag, size = 0x4, scoped, tag = 'scoped memory for tpu_custom_call.1']
    #allocation4 [shape = 's32[1]{0}', space=sflag, size = 0x4, scoped, tag = 'scoped memory for tpu_custom_call.1']
    #allocation5 [shape = 'u8[8192]{0}', space=vmem, size = 0x2000, scoped, tag = 'output window, operand 0, single buffered']
    %6 = vsyncpa [#allocation3], 0
    %7 = vsyncpa [#allocation4], 0
    // Predicated region
    $region2: #{tpu_custom_call.1} parent=1 // pred_check
      _
    $region3: #{tpu_custom_call.1} parent=1 // pred_check_branch
      %9 = sbr.rel (0) target = $region5
    $region4: #{tpu_custom_call.1} parent=1 // pred_region
      %11 = vsyncadd [#allocation3], 0
      %s13 = sshll.u32 %s0, 4
      %s14 = int_to_ptr.hbm [resolvable:$true] %s13
      %s15 = sshll.u32 [#allocation2], 4
      %s16 = int_to_ptr.vmem [resolvable:$true] %s15
      %18 = dma.hbm_to_vmem [thread:$0]  %s14, 256, %s16, [#allocation3]
    $region5: #{tpu_custom_call.1} parent=1 // pred_fallthru
      _
    // Predicated region
    $region6: #{tpu_custom_call.1} parent=1 // pred_check
      _
    $region7: #{tpu_custom_call.1} parent=1 // pred_check_branch
      %20 = sbr.rel (0) target = $region9
    $region8: #{tpu_custom_call.1} parent=1 // pred_region
      %22 = dma.done [#allocation3], 256
    $region9: #{tpu_custom_call.1} parent=1 // pred_fallthru
      _
    %v23 = vld [vmem:[#allocation2] sm:$0xff]
    %v24 = vld [vmem:[#allocation2 + $0x8] sm:$0xff]
    %v25 = vmax.f32 %v23, 0.0
    %v26 = vmax.f32 %v24, 0.0
    %v27 = vmul.f32 %v25, 2.0
    %v28 = vmul.f32 %v26, 2.0
    %v29 = vadd.f32 %v27, 1.0
    %v30 = vadd.f32 %v28, 1.0
    %31 = vst [vmem:[#allocation5] sm:$0xff] %v29
    %32 = vst [vmem:[#allocation5 + $0x8] sm:$0xff] %v30
    // Predicated region
    $region10: #{tpu_custom_call.1} parent=1 // pred_check
      _
    $region11: #{tpu_custom_call.1} parent=1 // pred_check_branch
      %34 = sbr.rel (0) target = $region13
    $region12: #{tpu_custom_call.1} parent=1 // pred_region
      %36 = vsyncadd [#allocation4], 0
      %s38 = sshll.u32 [#allocation5], 4
      %s39 = int_to_ptr.vmem [resolvable:$true] %s38
      %s40 = sshll.u32 %s1, 4
      %s41 = int_to_ptr.hbm [resolvable:$true] %s40
      %43 = dma.vmem_to_hbm [thread:$0]  %s39, 256, %s41, [#allocation4]
    $region13: #{tpu_custom_call.1} parent=1 // pred_fallthru
      _
    // Predicated region
    $region14: #{tpu_custom_call.1} parent=1 // pred_check
      _
    $region15: #{tpu_custom_call.1} parent=1 // pred_check_branch
      %45 = sbr.rel (0) target = $region17
    $region16: #{tpu_custom_call.1} parent=1 // pred_region
      %47 = dma.done [#allocation4], 256
    $region17: #{tpu_custom_call.1} parent=1 // pred_fallthru
      _
    %48 = vsyncpa [#allocation3], 1
    %49 = vsyncpa [#allocation4], 1

</llo_original>
